<compile_context>
chip_gen: v7x
topology: tpu7x:2x2x1
jax: 0.10.0
libtpu: 0.0.40
codegen_flags: <defaults>
</compile_context>

<pallas_src>
from functools import partial

import numpy as np
import jax
import jax.numpy as jnp
from jax import lax
from jax.experimental import pallas as pl
from jax.experimental.pallas import tpu as pltpu

RING = 8  # gather DMAs kept in flight per payload stream (power of two)


def _round_up(n, m):
    return ((n + m - 1) // m) * m


# --------------------------------------------------------------------------- #
# Pallas kernel: scalar-prefetched, tiled row gather (stable compaction)
#   prefetch: src_idx (N,) int32 -- source row for each output row (0-padded)
#             nk      (1,) int32 -- number of kept atoms
#   grid    : one TR-row output tile per step; per-row gather DMAs issued from a
#             RING-deep semaphore ring, then one full-tile store per output.
# --------------------------------------------------------------------------- #
def _make_gather_kernel(tile_rows):
    TR = tile_rows

    def gather_kernel(src_idx_ref, nk_ref, x_hbm, v_hbm,
                      x_out_ref, v_out_ref, x_buf, v_buf, sem):
        t = pl.program_id(0)
        nk = nk_ref[0]
        base = t * TR
        # number of kept rows that land in this output tile
        local = jnp.clip(nk - base, 0, TR)

        def issue(r):
            s = src_idx_ref[base + r]
            slot = r & (RING - 1)
            pltpu.make_async_copy(x_hbm.at[pl.ds(s, 1), :],
                                  x_buf.at[pl.ds(r, 1), :],
                                  sem.at[0, slot]).start()
            pltpu.make_async_copy(v_hbm.at[pl.ds(s, 1), :],
                                  v_buf.at[pl.ds(r, 1), :],
                                  sem.at[1, slot]).start()

        def wait_row(r):
            slot = r & (RING - 1)
            pltpu.make_async_copy(x_hbm.at[pl.ds(0, 1), :],
                                  x_buf.at[pl.ds(r, 1), :],
                                  sem.at[0, slot]).wait()
            pltpu.make_async_copy(v_hbm.at[pl.ds(0, 1), :],
                                  v_buf.at[pl.ds(r, 1), :],
                                  sem.at[1, slot]).wait()

        @pl.when(local > 0)
        def _():
            # prime the DMA ring
            @pl.loop(0, jnp.minimum(local, RING))
            def _(r):
                issue(r)

            # steady state: retire row r, keep RING copies in flight
            @pl.loop(0, local)
            def _(r):
                wait_row(r)

                @pl.when(r + RING < local)
                def _():
                    issue(r + RING)

        # one full-tile store per output; zero the padding rows (row >= nk)
        row_ids = base + lax.broadcasted_iota(jnp.int32, (TR, 1), 0)
        keep = row_ids < nk
        x_out_ref[...] = jnp.where(keep, x_buf[...], 0).astype(x_out_ref.dtype)
        v_out_ref[...] = jnp.where(keep, v_buf[...], 0).astype(v_out_ref.dtype)

    return gather_kernel


def atom_filter_pallas(x, v, z, pos, batch, remove_threshold, *, tile_rows=256):
    """Compacting atom filter. Returns padded (x, v, z, pos, batch) + n_kept (device)."""
    n_atoms, hidden = x.shape
    assert v.shape == (n_atoms, 3, hidden)
    z = z.astype(jnp.int32)
    batch = batch.astype(jnp.int32)
    v2 = v.reshape(n_atoms, 3 * hidden)  # free reshape (same layout), native dtype

    # ---- vectorized compaction schedule (no serial pass, no host sync) ----------
    mask = z > remove_threshold
    n_kept = jnp.sum(mask.astype(jnp.int32))
    src_idx = jnp.nonzero(mask, size=n_atoms, fill_value=0)[0].astype(jnp.int32)
    nk = n_kept.reshape(1)

    TR = min(_round_up(tile_rows, 8), _round_up(n_atoms, 8))
    grid = (pl.cdiv(n_atoms, TR),)

    grid_spec = pltpu.PrefetchScalarGridSpec(
        num_scalar_prefetch=2,
        grid=grid,
        in_specs=[pl.BlockSpec(memory_space=pl.ANY),   # x stays in HBM, gathered by DMA
                  pl.BlockSpec(memory_space=pl.ANY)],  # v stays in HBM, gathered by DMA
        out_specs=[pl.BlockSpec((TR, hidden), lambda t, sidx, nks: (t, 0)),
                   pl.BlockSpec((TR, 3 * hidden), lambda t, sidx, nks: (t, 0))],
        scratch_shapes=[pltpu.VMEM((TR, hidden), x.dtype),
                        pltpu.VMEM((TR, 3 * hidden), v.dtype),
                        pltpu.SemaphoreType.DMA((2, RING))],
    )

    x_out, v_out = pl.pallas_call(
        _make_gather_kernel(TR),
        out_shape=(jax.ShapeDtypeStruct((n_atoms, hidden), x.dtype),
                   jax.ShapeDtypeStruct((n_atoms, 3 * hidden), v.dtype)),
        grid_spec=grid_spec,
        compiler_params=pltpu.CompilerParams(
            dimension_semantics=("parallel",),       # independent output tiles
            vmem_limit_bytes=32 * 1024 * 1024,       # tiny tiles; safe on v5e/v6e/v7x
        ),
    )(src_idx, nk, x, v2)

    v_out = v_out.reshape(n_atoms, 3, hidden)

    # pos / z / batch are <= 5 scalars per row: gather them in the wrapper.
    keep_rows = jnp.arange(n_atoms) < n_kept
    pos_out = jnp.where(keep_rows[:, None], jnp.take(pos, src_idx, axis=0), 0)
    z_out = jnp.where(keep_rows, jnp.take(z, src_idx), 0)
    batch_out = jnp.where(keep_rows, jnp.take(batch, src_idx), 0)

    return x_out, v_out, z_out, pos_out, batch_out, n_kept


# --------------------------------------------------------------------------- #
# Synthetic inner model (the abstract `self.model`) — plain JAX glue.
# TODO(synk): the wrapped model is abstract in the PyTorch source; a deterministic
#             stand-in is used here to produce (x, v, z, pos, batch).
# --------------------------------------------------------------------------- #
def make_synthetic_model_params(key, num_species=16, hidden=32):
    k1, k2 = jax.random.split(key)
    emb = jax.random.normal(k1, (num_species, hidden), dtype=jnp.float32)
    w_pos = jax.random.normal(k2, (3, hidden), dtype=jnp.float32)
    return emb, w_pos


def synthetic_model(z, pos, batch, params):
    emb, w_pos = params
    x = emb[z] + pos @ w_pos                      # (N, H)
    v = pos[:, :, None] * x[:, None, :]           # (N, 3, H)
    return x, v, z, pos, batch


@partial(jax.jit, static_argnames=("tile_rows",))
def atom_filter_forward(z, pos, batch, params, remove_threshold, tile_rows=256):
    """Full AtomFilter.forward: inner model + Pallas compaction + device-side sample check."""
    x, v, z, pos, batch = synthetic_model(z, pos, batch, params)

    x_f, v_f, z_f, pos_f, batch_f, n_kept = atom_filter_pallas(
        x, v, z, pos, batch, remove_threshold, tile_rows=tile_rows)

    # Device-side equivalent of `len(batch.unique()) == n_samples` — no host sync here.
    n = z.shape[0]
    mask = z > remove_threshold
    present_all = jnp.zeros((n,), jnp.int32).at[batch].add(1) > 0
    present_kept = jnp.zeros((n,), jnp.int32).at[batch].add(mask.astype(jnp.int32)) > 0
    samples_ok = jnp.all(present_kept == present_all)

    return x_f, v_f, z_f, pos_f, batch_f, n_kept, samples_ok


# --------------------------------------------------------------------------- #
if __name__ == "__main__":
    key = jax.random.PRNGKey(0)
    k_params, k_z, k_pos = jax.random.split(key, 3)

    N, H = 24, 32                       # 24 atoms, hidden=32, 2 samples of 12 atoms
    remove_threshold = 2

    params = make_synthetic_model_params(k_params, num_species=16, hidden=H)
    z = jax.random.randint(k_z, (N,), 1, 11, dtype=jnp.int32)
    # guarantee at least one kept atom per sample
    z = z.at[0].set(8).at[12].set(9)
    pos = jax.random.normal(k_pos, (N, 3), dtype=jnp.float32)
    batch = jnp.array([0] * 12 + [1] * 12, dtype=jnp.int32)

    # tile_rows=8 keeps the demo tiny while exercising multiple grid tiles,
    # the DMA ring, and the zero-padded boundary tile.
    outs = atom_filter_forward(z, pos, batch, params, remove_threshold, tile_rows=8)
    jax.block_until_ready(outs)
    x_f, v_f, z_f, pos_f, batch_f, n_kept, samples_ok = outs

    assert bool(samples_ok), (
        "Some samples were completely filtered out by the atom filter. Make sure "
        f"that at least one atom per sample exists with Z > {remove_threshold}."
    )

    # ----- reference check (plain JAX boolean indexing, host-side) ----- #
    x_r, v_r, z_r, pos_r, batch_r = synthetic_model(z, pos, batch, params)
    mask = np.asarray(z_r) > remove_threshold
    n_ref = int(mask.sum())
    nk = int(n_kept)
    assert nk == n_ref, (nk, n_ref)
    np.testing.assert_allclose(np.asarray(x_f)[:nk], np.asarray(x_r)[mask],
                               rtol=1e-6, atol=1e-6)
    np.testing.assert_allclose(np.asarray(v_f)[:nk], np.asarray(v_r)[mask],
                               rtol=1e-6, atol=1e-6)
    np.testing.assert_allclose(np.asarray(pos_f)[:nk], np.asarray(pos_r)[mask],
                               rtol=1e-6, atol=1e-6)
    np.testing.assert_array_equal(np.asarray(z_f)[:nk], np.asarray(z_r)[mask])
    np.testing.assert_array_equal(np.asarray(batch_f)[:nk], np.asarray(batch_r)[mask])
    # padding rows are zero
    np.testing.assert_array_equal(np.asarray(x_f)[nk:], 0.0)
    np.testing.assert_array_equal(np.asarray(v_f)[nk:], 0.0)
    np.testing.assert_array_equal(np.asarray(z_f)[nk:], 0)

    print("KERNEL_OK")
</pallas_src>

<mosaic_0001>
module attributes {stable_mosaic.version = 11 : i64} {
  func.func @gather_kernel(%arg0: i32, %arg1: memref<24xi32, #tpu.memory_space<smem>>, %arg2: memref<1xi32, #tpu.memory_space<smem>>, %arg3: memref<24x32xf32, #tpu.memory_space<any>>, %arg4: memref<24x96xf32, #tpu.memory_space<any>>, %arg5: memref<8x32xf32, #tpu.memory_space<vmem>>, %arg6: memref<8x96xf32, #tpu.memory_space<vmem>>, %arg7: memref<8x32xf32, #tpu.memory_space<vmem>>, %arg8: memref<8x96xf32, #tpu.memory_space<vmem>>, %arg9: memref<2x8x!tpu.dma_semaphore, #tpu.memory_space<semaphore_mem>>) attributes {dimension_semantics = [#tpu.dimension_semantics<parallel>], iteration_bounds = array<i64: 3>, scalar_prefetch = 2 : i64, scratch_operands = 3 : i64, tpu.core_type = #tpu.core_type<tc>, window_params = [{}, {}, {transform_indices = @transform_2, window_bounds = array<i64: 8, 32>}, {transform_indices = @transform_3, window_bounds = array<i64: 8, 96>}]} {
    %c0 = arith.constant 0 : index
    %0 = memref.load %arg2[%c0] : memref<1xi32, #tpu.memory_space<smem>>
    %c8_i32 = arith.constant 8 : i32
    %1 = arith.muli %arg0, %c8_i32 : i32
    %2 = arith.subi %0, %1 : i32
    %c0_i32 = arith.constant 0 : i32
    %c8_i32_0 = arith.constant 8 : i32
    %3 = arith.maxsi %c0_i32, %2 : i32
    %4 = arith.minsi %c8_i32_0, %3 : i32
    %c0_i32_1 = arith.constant 0 : i32
    %5 = arith.cmpi sgt, %4, %c0_i32_1 : i32
    %6 = arith.extui %5 : i1 to i32
    %c0_i32_2 = arith.constant 0 : i32
    %7 = arith.cmpi ne, %6, %c0_i32_2 : i32
    scf.if %7 {
      %c8_i32_13 = arith.constant 8 : i32
      %27 = arith.minsi %4, %c8_i32_13 : i32
      %c0_i32_14 = arith.constant 0 : i32
      %28 = arith.subi %27, %c0_i32_14 : i32
      %c1_i32 = arith.constant 1 : i32
      %c1_i32_15 = arith.constant 1 : i32
      %29 = arith.subi %c1_i32, %c1_i32_15 : i32
      %30 = arith.addi %28, %29 : i32
      %c1_i32_16 = arith.constant 1 : i32
      %31 = arith.divsi %30, %c1_i32_16 : i32
      %c1_i32_17 = arith.constant 1 : i32
      %c0_i32_18 = arith.constant 0 : i32
      %c0_i32_19 = arith.constant 0 : i32
      %32 = arith.subi %31, %c0_i32_19 : i32
      %33 = arith.addi %c0_i32_19, %32 : i32
      %c1_i32_20 = arith.constant 1 : i32
      scf.for %arg10 = %c0_i32_19 to %33 step %c1_i32_20  : i32 {
        %40 = arith.muli %arg10, %c1_i32_17 : i32
        %41 = arith.addi %c0_i32_18, %40 : i32
        %42 = arith.addi %1, %41 : i32
        %43 = arith.index_cast %42 : i32 to index
        %44 = memref.load %arg1[%43] : memref<24xi32, #tpu.memory_space<smem>>
        %c7_i32 = arith.constant 7 : i32
        %45 = arith.andi %41, %c7_i32 : i32
        %c0_i32_29 = arith.constant 0 : i32
        %c0_i32_30 = arith.constant 0 : i32
        %46 = tpu.memref_slice %arg3[%44, %c0_i32_30] : memref<24x32xf32, #tpu.memory_space<any>> -> memref<1x32xf32, #tpu.memory_space<any>>
        %c0_i32_31 = arith.constant 0 : i32
        %47 = tpu.memref_slice %arg7[%41, %c0_i32_31] : memref<8x32xf32, #tpu.memory_space<vmem>> -> memref<1x32xf32, #tpu.memory_space<vmem>>
        %48 = tpu.memref_slice %arg9[%c0_i32_29, %45] : memref<2x8x!tpu.dma_semaphore, #tpu.memory_space<semaphore_mem>> -> memref<1x1x!tpu.dma_semaphore, #tpu.memory_space<semaphore_mem>>
        %49 = tpu.memref_squeeze %48 : memref<1x1x!tpu.dma_semaphore, #tpu.memory_space<semaphore_mem>> -> memref<!tpu.dma_semaphore, #tpu.memory_space<semaphore_mem>>
        tpu.enqueue_dma source(%46 : memref<1x32xf32, #tpu.memory_space<any>>) target(%47 : memref<1x32xf32, #tpu.memory_space<vmem>>) target_semaphore(%49 : memref<!tpu.dma_semaphore, #tpu.memory_space<semaphore_mem>>)
        %c1_i32_32 = arith.constant 1 : i32
        %c0_i32_33 = arith.constant 0 : i32
        %50 = tpu.memref_slice %arg4[%44, %c0_i32_33] : memref<24x96xf32, #tpu.memory_space<any>> -> memref<1x96xf32, #tpu.memory_space<any>>
        %c0_i32_34 = arith.constant 0 : i32
        %51 = tpu.memref_slice %arg8[%41, %c0_i32_34] : memref<8x96xf32, #tpu.memory_space<vmem>> -> memref<1x96xf32, #tpu.memory_space<vmem>>
        %52 = tpu.memref_slice %arg9[%c1_i32_32, %45] : memref<2x8x!tpu.dma_semaphore, #tpu.memory_space<semaphore_mem>> -> memref<1x1x!tpu.dma_semaphore, #tpu.memory_space<semaphore_mem>>
        %53 = tpu.memref_squeeze %52 : memref<1x1x!tpu.dma_semaphore, #tpu.memory_space<semaphore_mem>> -> memref<!tpu.dma_semaphore, #tpu.memory_space<semaphore_mem>>
        tpu.enqueue_dma source(%50 : memref<1x96xf32, #tpu.memory_space<any>>) target(%51 : memref<1x96xf32, #tpu.memory_space<vmem>>) target_semaphore(%53 : memref<!tpu.dma_semaphore, #tpu.memory_space<semaphore_mem>>)
      }
      %c0_i32_21 = arith.constant 0 : i32
      %34 = arith.subi %4, %c0_i32_21 : i32
      %c1_i32_22 = arith.constant 1 : i32
      %c1_i32_23 = arith.constant 1 : i32
      %35 = arith.subi %c1_i32_22, %c1_i32_23 : i32
      %36 = arith.addi %34, %35 : i32
      %c1_i32_24 = arith.constant 1 : i32
      %37 = arith.divsi %36, %c1_i32_24 : i32
      %c1_i32_25 = arith.constant 1 : i32
      %c0_i32_26 = arith.constant 0 : i32
      %c0_i32_27 = arith.constant 0 : i32
      %38 = arith.subi %37, %c0_i32_27 : i32
      %39 = arith.addi %c0_i32_27, %38 : i32
      %c1_i32_28 = arith.constant 1 : i32
      scf.for %arg10 = %c0_i32_27 to %39 step %c1_i32_28  : i32 {
        %40 = arith.muli %arg10, %c1_i32_25 : i32
        %41 = arith.addi %c0_i32_26, %40 : i32
        %c7_i32 = arith.constant 7 : i32
        %42 = arith.andi %41, %c7_i32 : i32
        %c0_i32_29 = arith.constant 0 : i32
        %c0_i32_30 = arith.constant 0 : i32
        %c0_i32_31 = arith.constant 0 : i32
        %43 = tpu.memref_slice %arg3[%c0_i32_30, %c0_i32_31] : memref<24x32xf32, #tpu.memory_space<any>> -> memref<1x32xf32, #tpu.memory_space<any>>
        %c0_i32_32 = arith.constant 0 : i32
        %44 = tpu.memref_slice %arg7[%41, %c0_i32_32] : memref<8x32xf32, #tpu.memory_space<vmem>> -> memref<1x32xf32, #tpu.memory_space<vmem>>
        %45 = tpu.memref_slice %arg9[%c0_i32_29, %42] : memref<2x8x!tpu.dma_semaphore, #tpu.memory_space<semaphore_mem>> -> memref<1x1x!tpu.dma_semaphore, #tpu.memory_space<semaphore_mem>>
        %46 = tpu.memref_squeeze %45 : memref<1x1x!tpu.dma_semaphore, #tpu.memory_space<semaphore_mem>> -> memref<!tpu.dma_semaphore, #tpu.memory_space<semaphore_mem>>
        tpu.wait_dma2 semaphore(%46 : memref<!tpu.dma_semaphore, #tpu.memory_space<semaphore_mem>>) src(%43 : memref<1x32xf32, #tpu.memory_space<any>>) dst(%44 : memref<1x32xf32, #tpu.memory_space<vmem>>)
        %c1_i32_33 = arith.constant 1 : i32
        %c0_i32_34 = arith.constant 0 : i32
        %c0_i32_35 = arith.constant 0 : i32
        %47 = tpu.memref_slice %arg4[%c0_i32_34, %c0_i32_35] : memref<24x96xf32, #tpu.memory_space<any>> -> memref<1x96xf32, #tpu.memory_space<any>>
        %c0_i32_36 = arith.constant 0 : i32
        %48 = tpu.memref_slice %arg8[%41, %c0_i32_36] : memref<8x96xf32, #tpu.memory_space<vmem>> -> memref<1x96xf32, #tpu.memory_space<vmem>>
        %49 = tpu.memref_slice %arg9[%c1_i32_33, %42] : memref<2x8x!tpu.dma_semaphore, #tpu.memory_space<semaphore_mem>> -> memref<1x1x!tpu.dma_semaphore, #tpu.memory_space<semaphore_mem>>
        %50 = tpu.memref_squeeze %49 : memref<1x1x!tpu.dma_semaphore, #tpu.memory_space<semaphore_mem>> -> memref<!tpu.dma_semaphore, #tpu.memory_space<semaphore_mem>>
        tpu.wait_dma2 semaphore(%50 : memref<!tpu.dma_semaphore, #tpu.memory_space<semaphore_mem>>) src(%47 : memref<1x96xf32, #tpu.memory_space<any>>) dst(%48 : memref<1x96xf32, #tpu.memory_space<vmem>>)
        %c8_i32_37 = arith.constant 8 : i32
        %51 = arith.addi %41, %c8_i32_37 : i32
        %52 = arith.cmpi slt, %51, %4 : i32
        %53 = arith.extui %52 : i1 to i32
        %c0_i32_38 = arith.constant 0 : i32
        %54 = arith.cmpi ne, %53, %c0_i32_38 : i32
        scf.if %54 {
          %c8_i32_39 = arith.constant 8 : i32
          %55 = arith.addi %41, %c8_i32_39 : i32
          %56 = arith.addi %1, %55 : i32
          %57 = arith.index_cast %56 : i32 to index
          %58 = memref.load %arg1[%57] : memref<24xi32, #tpu.memory_space<smem>>
          %c7_i32_40 = arith.constant 7 : i32
          %59 = arith.andi %55, %c7_i32_40 : i32
          %c0_i32_41 = arith.constant 0 : i32
          %c0_i32_42 = arith.constant 0 : i32
          %60 = tpu.memref_slice %arg3[%58, %c0_i32_42] : memref<24x32xf32, #tpu.memory_space<any>> -> memref<1x32xf32, #tpu.memory_space<any>>
          %c0_i32_43 = arith.constant 0 : i32
          %61 = tpu.memref_slice %arg7[%55, %c0_i32_43] : memref<8x32xf32, #tpu.memory_space<vmem>> -> memref<1x32xf32, #tpu.memory_space<vmem>>
          %62 = tpu.memref_slice %arg9[%c0_i32_41, %59] : memref<2x8x!tpu.dma_semaphore, #tpu.memory_space<semaphore_mem>> -> memref<1x1x!tpu.dma_semaphore, #tpu.memory_space<semaphore_mem>>
          %63 = tpu.memref_squeeze %62 : memref<1x1x!tpu.dma_semaphore, #tpu.memory_space<semaphore_mem>> -> memref<!tpu.dma_semaphore, #tpu.memory_space<semaphore_mem>>
          tpu.enqueue_dma source(%60 : memref<1x32xf32, #tpu.memory_space<any>>) target(%61 : memref<1x32xf32, #tpu.memory_space<vmem>>) target_semaphore(%63 : memref<!tpu.dma_semaphore, #tpu.memory_space<semaphore_mem>>)
          %c1_i32_44 = arith.constant 1 : i32
          %c0_i32_45 = arith.constant 0 : i32
          %64 = tpu.memref_slice %arg4[%58, %c0_i32_45] : memref<24x96xf32, #tpu.memory_space<any>> -> memref<1x96xf32, #tpu.memory_space<any>>
          %c0_i32_46 = arith.constant 0 : i32
          %65 = tpu.memref_slice %arg8[%55, %c0_i32_46] : memref<8x96xf32, #tpu.memory_space<vmem>> -> memref<1x96xf32, #tpu.memory_space<vmem>>
          %66 = tpu.memref_slice %arg9[%c1_i32_44, %59] : memref<2x8x!tpu.dma_semaphore, #tpu.memory_space<semaphore_mem>> -> memref<1x1x!tpu.dma_semaphore, #tpu.memory_space<semaphore_mem>>
          %67 = tpu.memref_squeeze %66 : memref<1x1x!tpu.dma_semaphore, #tpu.memory_space<semaphore_mem>> -> memref<!tpu.dma_semaphore, #tpu.memory_space<semaphore_mem>>
          tpu.enqueue_dma source(%64 : memref<1x96xf32, #tpu.memory_space<any>>) target(%65 : memref<1x96xf32, #tpu.memory_space<vmem>>) target_semaphore(%67 : memref<!tpu.dma_semaphore, #tpu.memory_space<semaphore_mem>>)
        } else {
        }
      }
    } else {
    }
    %8 = tpu.iota {dimensions = array<i32: 0>} : vector<8x1xi32>
    %9 = vector.broadcast %1 : i32 to vector<8x1xi32>
    %10 = arith.addi %9, %8 : vector<8x1xi32>
    %11 = vector.broadcast %0 : i32 to vector<8x1xi32>
    %12 = arith.cmpi slt, %10, %11 : vector<8x1xi32>
    %c0_3 = arith.constant 0 : index
    %c0_4 = arith.constant 0 : index
    %13 = vector.load %arg7[%c0_3, %c0_4] : memref<8x32xf32, #tpu.memory_space<vmem>>, vector<8x32xf32>
    %c0_i32_5 = arith.constant 0 : i32
    %14 = arith.sitofp %c0_i32_5 : i32 to f32
    %15 = vector.shape_cast %12 : vector<8x1xi1> to vector<8x1xi1>
    %16 = vector.broadcast %15 : vector<8x1xi1> to vector<8x32xi1>
    %17 = vector.broadcast %14 : f32 to vector<8x32xf32>
    %18 = arith.select %16, %13, %17 : vector<8x32xi1>, vector<8x32xf32>
    %c0_6 = arith.constant 0 : index
    %c0_7 = arith.constant 0 : index
    %19 = vector.load %arg5[%c0_6, %c0_7] : memref<8x32xf32, #tpu.memory_space<vmem>>, vector<8x32xf32>
    tpu.vector_store %arg5[%c0_6, %c0_7], %18 {strides = array<i32>} : memref<8x32xf32, #tpu.memory_space<vmem>>, vector<8x32xf32>,
    %c0_8 = arith.constant 0 : index
    %c0_9 = arith.constant 0 : index
    %20 = vector.load %arg8[%c0_8, %c0_9] : memref<8x96xf32, #tpu.memory_space<vmem>>, vector<8x96xf32>
    %c0_i32_10 = arith.constant 0 : i32
    %21 = arith.sitofp %c0_i32_10 : i32 to f32
    %22 = vector.shape_cast %12 : vector<8x1xi1> to vector<8x1xi1>
    %23 = vector.broadcast %22 : vector<8x1xi1> to vector<8x96xi1>
    %24 = vector.broadcast %21 : f32 to vector<8x96xf32>
    %25 = arith.select %23, %20, %24 : vector<8x96xi1>, vector<8x96xf32>
    %c0_11 = arith.constant 0 : index
    %c0_12 = arith.constant 0 : index
    %26 = vector.load %arg6[%c0_11, %c0_12] : memref<8x96xf32, #tpu.memory_space<vmem>>, vector<8x96xf32>
    tpu.vector_store %arg6[%c0_11, %c0_12], %25 {strides = array<i32>} : memref<8x96xf32, #tpu.memory_space<vmem>>, vector<8x96xf32>,
    return
  }
  func.func @transform_2(%arg0: i32, %arg1: memref<24xi32, #tpu.memory_space<smem>>, %arg2: memref<1xi32, #tpu.memory_space<smem>>) -> (i32, i32) {
    %c0_i32 = arith.constant 0 : i32
    %c0_i32_0 = arith.constant 0 : i32
    return %arg0, %c0_i32 : i32, i32
  }
  func.func @transform_3(%arg0: i32, %arg1: memref<24xi32, #tpu.memory_space<smem>>, %arg2: memref<1xi32, #tpu.memory_space<smem>>) -> (i32, i32) {
    %c0_i32 = arith.constant 0 : i32
    %c0_i32_0 = arith.constant 0 : i32
    return %arg0, %c0_i32 : i32, i32
  }
}

</mosaic_0001>

<llo_original>
// kernel: atom_filter_forward.1
$region0: #{atom_filter_forward.1}
  #allocation0 [shape = 'u32[]', space=smem, size = 0x4, offset = 0x4, fixed_abs, tag = 'smem constant byte address 0x4 - core index']
  #allocation1 [shape = 'u32[144,128]{1,0:T(1,128)}', space=vmem, size = 0x12000, scoped, tag = 'internal scratch']
  #allocation2 [shape = 'f32[8,32]{1,0:T(8,128)}', space=vmem, size = 0x1000, scoped, tag = 'scratch operand']
  #allocation3 [shape = 'f32[8,96]{1,0:T(8,128)}', space=vmem, size = 0x1000, scoped, tag = 'scratch operand']
  #allocation4 [shape = 's32[16]{0}', space=sflag, size = 0x40, scoped, tag = 'scratch operand']
  #allocation5 [shape = 's32[1]{0}', space=sflag, size = 0x4, scoped, tag = 'scoped memory for atom_filter_forward.1']
  #allocation6 [shape = 'u8[512]{0}', space=smem, size = 0x200, scoped, tag = 'prefetched SMEM operand 0']
  #allocation7 [shape = 's32[1]{0:T(128)S(6)}', space=smem, size = 0x200, scoped, tag = 'prefetched SMEM operand 1']
  #allocation10 [shape = 's32[]', space=sflag, size = 0x4, offset = 0, fixed_abs, tag = 'sflag constant byte address 0x0 - dummy sync flag']
  #allocation11 [shape = 's32[]', space=sflag, size = 0x4, offset = 0, fixed_abs, tag = 'sflag constant byte address 0x0 - dummy sync flag']
  #allocation12 [shape = 's32[]', space=sflag, size = 0x4, offset = 0, fixed_abs, tag = 'sflag constant byte address 0x0 - dummy sync flag']
  #allocation13 [shape = 's32[]', space=sflag, size = 0x4, offset = 0, fixed_abs, tag = 'sflag constant byte address 0x0 - dummy sync flag']
  %s0 = inlined_call_operand.vmem [shape: s32[24], index: 0, kind: input, shape index: {}]
  %s1 = inlined_call_operand.<no memory space> [shape: s32[1], index: 1, kind: input, shape index: {}]
  %s2 = inlined_call_operand.vmem [shape: f32[24,32], index: 2, kind: input, shape index: {}]
  %s3 = inlined_call_operand.vmem [shape: f32[24,96], index: 3, kind: input, shape index: {}]
  %s4 = inlined_call_operand.hbm [shape: f32[24,32], index: 4, kind: output, shape index: {0}]
  %s5 = inlined_call_operand.vmem [shape: f32[24,96], index: 5, kind: output, shape index: {1}]
  %6 = xla_tuple %s4, %s5
  %s7 = sld [smem:[#allocation0]]
  $region175: #{atom_filter_forward.1} parent=0
    _
  %s9 = ssub.s32 1, %s7
  %s10 = scalar_select 0, %s9, %s7
  %s11 = sshll.u32 %s0, 4
  %s12 = int_to_ptr.vmem [resolvable:$true] %s11
  %14 = dma.vmem_to_smem %s12, 16, [#allocation6], [#allocation5]
  %15 = sst [smem:[#allocation7]] %s1
  %16 = dma.done [#allocation5], 16
  %17 = sfence
  $region1: #{atom_filter_forward.1} parent=0
    #allocation8 [shape = 'u8[8192]{0}', space=vmem, size = 0x2000, scoped, tag = 'output window, operand 0']
    #allocation9 [shape = 's32[2]{0}', space=sflag, size = 0x8, scoped, tag = 'scoped memory for atom_filter_forward.1']
    %18 = vsyncpa [#allocation9], 0
    %s19 = scalar_lea.sflag [#allocation9], 1
    %20 = vsyncpa %s19, 0
    loop: start=0, step=1, limit=4
    $region2: #{atom_filter_forward.1} parent=1 // loop_pre_header
      _
    $region3: #{atom_filter_forward.1} parent=1 // loop_header
      %s22 = sphi 0, %s26
      %p23 = scmp.ge.s32.totalorder %s22, 4
      %s31 = sphi 0, %s33
      %s34 = sphi 0, %s31
      %s44 = sphi 0, %s34
      %s50 = sphi 0, %s52
      %s53 = sphi 0, %s50
      %s63 = sphi 0, %s53
    $region4: #{atom_filter_forward.1} parent=1 // loop_header_branch
      %25 = sbr.rel (%p23) target = $region8
    $region5: #{atom_filter_forward.1} parent=1 // loop_body
      %s27 = ssub.s32 %s22, 1
      %s28 = sadd.s32 %s22, 1
      %s29 = ssub.s32 %s22, %s28
      %p30 = scmp.eq.s32.totalorder %s29, 0
      %s32 = sadd.s32 %s31, 1
      %s33 = scalar_select %p30, %s31, %s32
      %p35 = pneg %p30
      %p36 = scmp.eq.s32.totalorder %s22, 2
      %p37 = por %p35, %p36
      %p38 = scmp.ne.s32.totalorder %s31, %s34
      %p39 = scmp.eq.s32.totalorder %s22, 0
      %p40 = por %p38, %p39
      %p41 = scmp.ne.s32.totalorder %s31, %s34
      %p42 = scmp.eq.s32.totalorder %s27, 2
      %p43 = por %p41, %p42
      %p45 = scmp.ne.s32.totalorder %s34, %s44
      %p46 = scmp.eq.s32.totalorder %s27, 0
      %p47 = por %p45, %p46
      %s48 = ssub.s32 %s22, %s28
      %p49 = scmp.eq.s32.totalorder %s48, 0
      %s51 = sadd.s32 %s50, 1
      %s52 = scalar_select %p49, %s50, %s51
      %p54 = pneg %p49
      %p55 = scmp.eq.s32.totalorder %s22, 2
      %p56 = por %p54, %p55
      %p57 = scmp.ne.s32.totalorder %s50, %s53
      %p58 = scmp.eq.s32.totalorder %s22, 0
      %p59 = por %p57, %p58
      %p60 = scmp.ne.s32.totalorder %s50, %s53
      %p61 = scmp.eq.s32.totalorder %s27, 2
      %p62 = por %p60, %p61
      %p64 = scmp.ne.s32.totalorder %s53, %s63
      %p65 = scmp.eq.s32.totalorder %s27, 0
      %p66 = por %p64, %p65
      %p67 = scmp.lt.s32.totalorder %s22, 3
      // Predicated region
      $region9: #{atom_filter_forward.1} parent=5 // pred_check
        %p68 = pneg %p67
      $region10: #{atom_filter_forward.1} parent=5 // pred_check_branch
        %70 = sbr.rel (%p68) target = $region12
      $region11: #{atom_filter_forward.1} parent=5 // pred_region
        %p71 = pneg %p40
        %p72 = pneg %p37
        %s73 = sand.u32 %s31, 1
        %s74 = scalar_lea.sflag [#allocation9], %s73
        %s75 = sand.u32 %s31, 1
        %s76 = smul.addr %s75, 8
        %s77 = scalar_lea.vmem [#allocation8], %s76
        %p78 = pneg %p59
        %p79 = pneg %p56
        %p80 = scmp.lt.s32.totalorder %s22, 2
        %s81 = scalar_select %p80, %s22, 2
        %s82 = smul.addr %s81, 8
        %s83 = scalar_lea.vmem %s5, %s82
        %p84 = scmp.lt.s32.totalorder %s22, 2
        %s85 = scalar_select %p84, %s22, 2
        %s86 = smul.addr %s85, 8
        %s87 = scalar_lea.vmem %s5, %s86
        %s88 = sld [smem:[#allocation7]]
        %s89 = smul.u32 %s22, 8
        %s90 = ssub.s32 %s88, %s89
        %p91 = scmp.gt.s32.totalorder %s90, 0
        %s92 = scalar_select %p91, %s90, 0
        %p93 = scmp.lt.s32.totalorder %s92, 8
        %s94 = scalar_select %p93, %s92, 8
        %p95 = scmp.gt.s32.totalorder %s94, 0
        // Predicated region
        $region13: #{atom_filter_forward.1} parent=11 // pred_check
          %p96 = pneg %p95
        $region14: #{atom_filter_forward.1} parent=11 // pred_check_branch
          %98 = sbr.rel (%p96) target = $region16
        $region15: #{atom_filter_forward.1} parent=11 // pred_region
          %p99 = scmp.lt.s32.totalorder %s94, 8
          %s100 = scalar_select %p99, %s94, 8
          // While loop
          $region17: #{atom_filter_forward.1} parent=15 // loop_pre_header
            _
          $region18: #{atom_filter_forward.1} parent=15 // loop_header
            %s102 = sphi 0, %s104
            %p103 = scmp.ge.s32.totalorder %s102, %s100
          $region19: #{atom_filter_forward.1} parent=15 // loop_header_branch
            %106 = sbr.rel (%p103) target = $region23
          $region20: #{atom_filter_forward.1} parent=15 // loop_body
            %s107 = sadd.s32 %s89, %s102
            %s108 = sld [smem:[#allocation6 + %s107]]
            %s109 = sand.u32 %s102, 7
            %s110 = scalar_lea.vmem %s2, %s108
            %s111 = scalar_lea.vmem [#allocation2], %s102
            %s112 = scalar_lea.sflag [#allocation4], %s109
            %p114 = scmp.lt.u32.totalorder 1, 8
            %p115 = pneg %p114
            // Predicated region
            $region24: #{atom_filter_forward.1} parent=20 // pred_check
              _
            $region25: #{atom_filter_forward.1} parent=20 // pred_check_branch
              %117 = sbr.rel (%p114) target = $region27
            $region26: #{atom_filter_forward.1} parent=20 // pred_region
              %s132 = sand.u32 1, 7
              %p133 = scmp.eq.s32.totalorder %s132, 0
              %p134 = pneg %p133
              // Predicated region
              $region39: #{atom_filter_forward.1} parent=26 // pred_check
                _
              $region40: #{atom_filter_forward.1} parent=26 // pred_check_branch
                %136 = sbr.rel (%p133) target = $region42
              $region41: #{atom_filter_forward.1} parent=26 // pred_region
                %s137 = sand.u32 1, 7
                %s138 = ssub.s32 1, %s137
                %s139 = scalar_lea.vmem %s110, %s138
                %s140 = ssub.s32 1, %s137
                %s141 = scalar_lea.vmem %s111, %s140 [#allocation2]
                %s142 = sshllo.u32 0, %s137
                loop: start=0, step=1, limit=1
                $region43: #{atom_filter_forward.1} parent=41 // loop_pre_header
                  _
                $region44: #{atom_filter_forward.1} parent=41 // loop_header
                  %s144 = sphi 0, %s148
                  %p145 = scmp.ge.s32.totalorder %s144, 1
                  %s149 = sphi %s139, %s139
                  %s150 = sphi %s141, %s141
                $region45: #{atom_filter_forward.1} parent=41 // loop_header_branch
                  %147 = sbr.rel (%p145) target = $region49
                $region46: #{atom_filter_forward.1} parent=41 // loop_body
                  %v151 = vld [vmem:[%s149] sm:%s142]
                  %152 = vst [vmem:[%s150] sm:%s142] %v151
                $region47: #{atom_filter_forward.1} parent=41 // loop_footer
                  %s148 = sadd.s32 1, %s144
                $region48: #{atom_filter_forward.1} parent=41 // loop_footer_branch
                  %143 = sbr.rel target = $region44
                $region49: #{atom_filter_forward.1} parent=41 // loop_exit
                  _
              $region42: #{atom_filter_forward.1} parent=26 // pred_fallthru
                _
            $region27: #{atom_filter_forward.1} parent=20 // pred_fallthru
              _
            // Predicated region
            $region28: #{atom_filter_forward.1} parent=20 // pred_check
              %p118 = pneg %p114
            $region29: #{atom_filter_forward.1} parent=20 // pred_check_branch
              %120 = sbr.rel (%p118) target = $region31
            $region30: #{atom_filter_forward.1} parent=20 // pred_region
              %s121 = sshllo.u32 0, 1
              loop: start=0, step=1, limit=1
              $region32: #{atom_filter_forward.1} parent=30 // loop_pre_header
                _
              $region33: #{atom_filter_forward.1} parent=30 // loop_header
                %s123 = sphi 0, %s127
                %p124 = scmp.ge.s32.totalorder %s123, 1
                %s128 = sphi %s110, %s110
                %s129 = sphi %s111, %s111
              $region34: #{atom_filter_forward.1} parent=30 // loop_header_branch
                %126 = sbr.rel (%p124) target = $region38
              $region35: #{atom_filter_forward.1} parent=30 // loop_body
                %v130 = vld [vmem:[%s128] sm:%s121]
                %131 = vst [vmem:[%s129] sm:%s121] %v130
              $region36: #{atom_filter_forward.1} parent=30 // loop_footer
                %s127 = sadd.s32 1, %s123
              $region37: #{atom_filter_forward.1} parent=30 // loop_footer_branch
                %122 = sbr.rel target = $region33
              $region38: #{atom_filter_forward.1} parent=30 // loop_exit
                _
            $region31: #{atom_filter_forward.1} parent=20 // pred_fallthru
              _
            // Predicated region
            $region50: #{atom_filter_forward.1} parent=20 // pred_check
              _
            $region51: #{atom_filter_forward.1} parent=20 // pred_check_branch
              %155 = sbr.rel (0) target = $region53
            $region52: #{atom_filter_forward.1} parent=20 // pred_region
              %156 = vsyncadd %s112, 16
            $region53: #{atom_filter_forward.1} parent=20 // pred_fallthru
              _
            %s157 = scalar_lea.vmem %s3, %s108
            %s158 = scalar_lea.vmem [#allocation3], %s102
            %s159 = sadd.s32 %s109, 8
            %s160 = scalar_lea.sflag [#allocation4], %s159
            %p162 = scmp.lt.u32.totalorder 1, 8
            %p163 = pneg %p162
            // Predicated region
            $region54: #{atom_filter_forward.1} parent=20 // pred_check
              _
            $region55: #{atom_filter_forward.1} parent=20 // pred_check_branch
              %165 = sbr.rel (%p162) target = $region57
            $region56: #{atom_filter_forward.1} parent=20 // pred_region
              %s180 = sand.u32 1, 7
              %p181 = scmp.eq.s32.totalorder %s180, 0
              %p182 = pneg %p181
              // Predicated region
              $region69: #{atom_filter_forward.1} parent=56 // pred_check
                _
              $region70: #{atom_filter_forward.1} parent=56 // pred_check_branch
                %184 = sbr.rel (%p181) target = $region72
              $region71: #{atom_filter_forward.1} parent=56 // pred_region
                %s185 = sand.u32 1, 7
                %s186 = ssub.s32 1, %s185
                %s187 = scalar_lea.vmem %s157, %s186
                %s188 = ssub.s32 1, %s185
                %s189 = scalar_lea.vmem %s158, %s188 [#allocation3]
                %s190 = sshllo.u32 0, %s185
                loop: start=0, step=1, limit=1
                $region73: #{atom_filter_forward.1} parent=71 // loop_pre_header
                  _
                $region74: #{atom_filter_forward.1} parent=71 // loop_header
                  %s192 = sphi 0, %s196
                  %p193 = scmp.ge.s32.totalorder %s192, 1
                  %s197 = sphi %s187, %s187
                  %s198 = sphi %s189, %s189
                $region75: #{atom_filter_forward.1} parent=71 // loop_header_branch
                  %195 = sbr.rel (%p193) target = $region79
                $region76: #{atom_filter_forward.1} parent=71 // loop_body
                  %v199 = vld [vmem:[%s197] sm:%s190]
                  %200 = vst [vmem:[%s198] sm:%s190] %v199
                $region77: #{atom_filter_forward.1} parent=71 // loop_footer
                  %s196 = sadd.s32 1, %s192
                $region78: #{atom_filter_forward.1} parent=71 // loop_footer_branch
                  %191 = sbr.rel target = $region74
                $region79: #{atom_filter_forward.1} parent=71 // loop_exit
                  _
              $region72: #{atom_filter_forward.1} parent=56 // pred_fallthru
                _
            $region57: #{atom_filter_forward.1} parent=20 // pred_fallthru
              _
            // Predicated region
            $region58: #{atom_filter_forward.1} parent=20 // pred_check
              %p166 = pneg %p162
            $region59: #{atom_filter_forward.1} parent=20 // pred_check_branch
              %168 = sbr.rel (%p166) target = $region61
            $region60: #{atom_filter_forward.1} parent=20 // pred_region
              %s169 = sshllo.u32 0, 1
              loop: start=0, step=1, limit=1
              $region62: #{atom_filter_forward.1} parent=60 // loop_pre_header
                _
              $region63: #{atom_filter_forward.1} parent=60 // loop_header
                %s171 = sphi 0, %s175
                %p172 = scmp.ge.s32.totalorder %s171, 1
                %s176 = sphi %s157, %s157
                %s177 = sphi %s158, %s158
              $region64: #{atom_filter_forward.1} parent=60 // loop_header_branch
                %174 = sbr.rel (%p172) target = $region68
              $region65: #{atom_filter_forward.1} parent=60 // loop_body
                %v178 = vld [vmem:[%s176] sm:%s169]
                %179 = vst [vmem:[%s177] sm:%s169] %v178
              $region66: #{atom_filter_forward.1} parent=60 // loop_footer
                %s175 = sadd.s32 1, %s171
              $region67: #{atom_filter_forward.1} parent=60 // loop_footer_branch
                %170 = sbr.rel target = $region63
              $region68: #{atom_filter_forward.1} parent=60 // loop_exit
                _
            $region61: #{atom_filter_forward.1} parent=20 // pred_fallthru
              _
            // Predicated region
            $region80: #{atom_filter_forward.1} parent=20 // pred_check
              _
            $region81: #{atom_filter_forward.1} parent=20 // pred_check_branch
              %203 = sbr.rel (0) target = $region83
            $region82: #{atom_filter_forward.1} parent=20 // pred_region
              %204 = vsyncadd %s160, 16
            $region83: #{atom_filter_forward.1} parent=20 // pred_fallthru
              _
          $region21: #{atom_filter_forward.1} parent=15 // loop_footer
            %s104 = sadd.s32 %s102, 1
          $region22: #{atom_filter_forward.1} parent=15 // loop_footer_branch
            %101 = sbr.rel target = $region18
          $region23: #{atom_filter_forward.1} parent=15 // loop_exit
            _
          // While loop
          $region84: #{atom_filter_forward.1} parent=15 // loop_pre_header
            _
          $region85: #{atom_filter_forward.1} parent=15 // loop_header
            %s206 = sphi 0, %s208
            %p207 = scmp.ge.s32.totalorder %s206, %s94
          $region86: #{atom_filter_forward.1} parent=15 // loop_header_branch
            %210 = sbr.rel (%p207) target = $region90
          $region87: #{atom_filter_forward.1} parent=15 // loop_body
            %s211 = sand.u32 %s206, 7
            %s212 = scalar_lea.sflag [#allocation4], %s211
            %s213 = smul.u32 1, 1
            %s214 = sshll.u32 %s213, 4
            %215 = dma.done %s212, %s214
            %s216 = sadd.s32 %s211, 8
            %s217 = scalar_lea.sflag [#allocation4], %s216
            %s218 = sshll.u32 %s213, 4
            %219 = dma.done %s217, %s218
            %s220 = sadd.s32 %s206, 8
            %p221 = scmp.lt.s32.totalorder %s220, %s94
            // Predicated region
            $region91: #{atom_filter_forward.1} parent=87 // pred_check
              %p222 = pneg %p221
            $region92: #{atom_filter_forward.1} parent=87 // pred_check_branch
              %224 = sbr.rel (%p222) target = $region94
            $region93: #{atom_filter_forward.1} parent=87 // pred_region
              %s225 = sadd.s32 %s89, %s220
              %s226 = sld [smem:[#allocation6 + %s225]]
              %s227 = sand.u32 %s220, 7
              %s228 = scalar_lea.vmem %s2, %s226
              %s229 = scalar_lea.vmem [#allocation2], %s220
              %s230 = scalar_lea.sflag [#allocation4], %s227
              %p232 = scmp.lt.u32.totalorder 1, 8
              %p233 = pneg %p232
              // Predicated region
              $region95: #{atom_filter_forward.1} parent=93 // pred_check
                _
              $region96: #{atom_filter_forward.1} parent=93 // pred_check_branch
                %235 = sbr.rel (%p232) target = $region98
              $region97: #{atom_filter_forward.1} parent=93 // pred_region
                %s250 = sand.u32 1, 7
                %p251 = scmp.eq.s32.totalorder %s250, 0
                %p252 = pneg %p251
                // Predicated region
                $region110: #{atom_filter_forward.1} parent=97 // pred_check
                  _
                $region111: #{atom_filter_forward.1} parent=97 // pred_check_branch
                  %254 = sbr.rel (%p251) target = $region113
                $region112: #{atom_filter_forward.1} parent=97 // pred_region
                  %s255 = sand.u32 1, 7
                  %s256 = ssub.s32 1, %s255
                  %s257 = scalar_lea.vmem %s228, %s256
                  %s258 = ssub.s32 1, %s255
                  %s259 = scalar_lea.vmem %s229, %s258 [#allocation2]
                  %s260 = sshllo.u32 0, %s255
                  loop: start=0, step=1, limit=1
                  $region114: #{atom_filter_forward.1} parent=112 // loop_pre_header
                    _
                  $region115: #{atom_filter_forward.1} parent=112 // loop_header
                    %s262 = sphi 0, %s266
                    %p263 = scmp.ge.s32.totalorder %s262, 1
                    %s267 = sphi %s257, %s257
                    %s268 = sphi %s259, %s259
                  $region116: #{atom_filter_forward.1} parent=112 // loop_header_branch
                    %265 = sbr.rel (%p263) target = $region120
                  $region117: #{atom_filter_forward.1} parent=112 // loop_body
                    %v269 = vld [vmem:[%s267] sm:%s260]
                    %270 = vst [vmem:[%s268] sm:%s260] %v269
                  $region118: #{atom_filter_forward.1} parent=112 // loop_footer
                    %s266 = sadd.s32 1, %s262
                  $region119: #{atom_filter_forward.1} parent=112 // loop_footer_branch
                    %261 = sbr.rel target = $region115
                  $region120: #{atom_filter_forward.1} parent=112 // loop_exit
                    _
                $region113: #{atom_filter_forward.1} parent=97 // pred_fallthru
                  _
              $region98: #{atom_filter_forward.1} parent=93 // pred_fallthru
                _
              // Predicated region
              $region99: #{atom_filter_forward.1} parent=93 // pred_check
                %p236 = pneg %p232
              $region100: #{atom_filter_forward.1} parent=93 // pred_check_branch
                %238 = sbr.rel (%p236) target = $region102
              $region101: #{atom_filter_forward.1} parent=93 // pred_region
                %s239 = sshllo.u32 0, 1
                loop: start=0, step=1, limit=1
                $region103: #{atom_filter_forward.1} parent=101 // loop_pre_header
                  _
                $region104: #{atom_filter_forward.1} parent=101 // loop_header
                  %s241 = sphi 0, %s245
                  %p242 = scmp.ge.s32.totalorder %s241, 1
                  %s246 = sphi %s228, %s228
                  %s247 = sphi %s229, %s229
                $region105: #{atom_filter_forward.1} parent=101 // loop_header_branch
                  %244 = sbr.rel (%p242) target = $region109
                $region106: #{atom_filter_forward.1} parent=101 // loop_body
                  %v248 = vld [vmem:[%s246] sm:%s239]
                  %249 = vst [vmem:[%s247] sm:%s239] %v248
                $region107: #{atom_filter_forward.1} parent=101 // loop_footer
                  %s245 = sadd.s32 1, %s241
                $region108: #{atom_filter_forward.1} parent=101 // loop_footer_branch
                  %240 = sbr.rel target = $region104
                $region109: #{atom_filter_forward.1} parent=101 // loop_exit
                  _
              $region102: #{atom_filter_forward.1} parent=93 // pred_fallthru
                _
              // Predicated region
              $region121: #{atom_filter_forward.1} parent=93 // pred_check
                _
              $region122: #{atom_filter_forward.1} parent=93 // pred_check_branch
                %273 = sbr.rel (0) target = $region124
              $region123: #{atom_filter_forward.1} parent=93 // pred_region
                %274 = vsyncadd %s230, 16
              $region124: #{atom_filter_forward.1} parent=93 // pred_fallthru
                _
              %s275 = scalar_lea.vmem %s3, %s226
              %s276 = scalar_lea.vmem [#allocation3], %s220
              %s277 = sadd.s32 %s227, 8
              %s278 = scalar_lea.sflag [#allocation4], %s277
              %p280 = scmp.lt.u32.totalorder 1, 8
              %p281 = pneg %p280
              // Predicated region
              $region125: #{atom_filter_forward.1} parent=93 // pred_check
                _
              $region126: #{atom_filter_forward.1} parent=93 // pred_check_branch
                %283 = sbr.rel (%p280) target = $region128
              $region127: #{atom_filter_forward.1} parent=93 // pred_region
                %s298 = sand.u32 1, 7
                %p299 = scmp.eq.s32.totalorder %s298, 0
                %p300 = pneg %p299
                // Predicated region
                $region140: #{atom_filter_forward.1} parent=127 // pred_check
                  _
                $region141: #{atom_filter_forward.1} parent=127 // pred_check_branch
                  %302 = sbr.rel (%p299) target = $region143
                $region142: #{atom_filter_forward.1} parent=127 // pred_region
                  %s303 = sand.u32 1, 7
                  %s304 = ssub.s32 1, %s303
                  %s305 = scalar_lea.vmem %s275, %s304
                  %s306 = ssub.s32 1, %s303
                  %s307 = scalar_lea.vmem %s276, %s306 [#allocation3]
                  %s308 = sshllo.u32 0, %s303
                  loop: start=0, step=1, limit=1
                  $region144: #{atom_filter_forward.1} parent=142 // loop_pre_header
                    _
                  $region145: #{atom_filter_forward.1} parent=142 // loop_header
                    %s310 = sphi 0, %s314
                    %p311 = scmp.ge.s32.totalorder %s310, 1
                    %s315 = sphi %s305, %s305
                    %s316 = sphi %s307, %s307
                  $region146: #{atom_filter_forward.1} parent=142 // loop_header_branch
                    %313 = sbr.rel (%p311) target = $region150
                  $region147: #{atom_filter_forward.1} parent=142 // loop_body
                    %v317 = vld [vmem:[%s315] sm:%s308]
                    %318 = vst [vmem:[%s316] sm:%s308] %v317
                  $region148: #{atom_filter_forward.1} parent=142 // loop_footer
                    %s314 = sadd.s32 1, %s310
                  $region149: #{atom_filter_forward.1} parent=142 // loop_footer_branch
                    %309 = sbr.rel target = $region145
                  $region150: #{atom_filter_forward.1} parent=142 // loop_exit
                    _
                $region143: #{atom_filter_forward.1} parent=127 // pred_fallthru
                  _
              $region128: #{atom_filter_forward.1} parent=93 // pred_fallthru
                _
              // Predicated region
              $region129: #{atom_filter_forward.1} parent=93 // pred_check
                %p284 = pneg %p280
              $region130: #{atom_filter_forward.1} parent=93 // pred_check_branch
                %286 = sbr.rel (%p284) target = $region132
              $region131: #{atom_filter_forward.1} parent=93 // pred_region
                %s287 = sshllo.u32 0, 1
                loop: start=0, step=1, limit=1
                $region133: #{atom_filter_forward.1} parent=131 // loop_pre_header
                  _
                $region134: #{atom_filter_forward.1} parent=131 // loop_header
                  %s289 = sphi 0, %s293
                  %p290 = scmp.ge.s32.totalorder %s289, 1
                  %s294 = sphi %s275, %s275
                  %s295 = sphi %s276, %s276
                $region135: #{atom_filter_forward.1} parent=131 // loop_header_branch
                  %292 = sbr.rel (%p290) target = $region139
                $region136: #{atom_filter_forward.1} parent=131 // loop_body
                  %v296 = vld [vmem:[%s294] sm:%s287]
                  %297 = vst [vmem:[%s295] sm:%s287] %v296
                $region137: #{atom_filter_forward.1} parent=131 // loop_footer
                  %s293 = sadd.s32 1, %s289
                $region138: #{atom_filter_forward.1} parent=131 // loop_footer_branch
                  %288 = sbr.rel target = $region134
                $region139: #{atom_filter_forward.1} parent=131 // loop_exit
                  _
              $region132: #{atom_filter_forward.1} parent=93 // pred_fallthru
                _
              // Predicated region
              $region151: #{atom_filter_forward.1} parent=93 // pred_check
                _
              $region152: #{atom_filter_forward.1} parent=93 // pred_check_branch
                %321 = sbr.rel (0) target = $region154
              $region153: #{atom_filter_forward.1} parent=93 // pred_region
                %322 = vsyncadd %s278, 16
              $region154: #{atom_filter_forward.1} parent=93 // pred_fallthru
                _
            $region94: #{atom_filter_forward.1} parent=87 // pred_fallthru
              _
          $region88: #{atom_filter_forward.1} parent=15 // loop_footer
            %s208 = sadd.s32 %s206, 1
          $region89: #{atom_filter_forward.1} parent=15 // loop_footer_branch
            %205 = sbr.rel target = $region85
          $region90: #{atom_filter_forward.1} parent=15 // loop_exit
            _
        $region16: #{atom_filter_forward.1} parent=11 // pred_fallthru
          _
        %v323 = vlaneseq
        %v324 = vshrl.u32 %v323, 7
        %v325 = vstv %s89
        %v326 = vadd.s32 %v325, %v324
        %v327 = vstv %s88
        %vm328 = vcmp.lt.s32.totalorder %v326, %v327
        %v329 = vld [vmem:[#allocation2] sm:$0xff]
        %v330 = vsel %vm328, 1, 0
        %vm331 = vcmp.eq.s32.totalorder %v330, 1
        %v332 = vsel %vm331, %v329, 0.0
        %vm333 = vcmask 261120
        %334 = vst.msk [vmem:[%s77] sm:$0xff] %vm333, %v332
        %v335 = vld [vmem:[#allocation3] sm:$0xff]
        %v336 = vsel %vm331, %v335, 0.0
        %vm337 = vcmask 785408
        %338 = vst.msk [vmem:[%s87] sm:$0xff] %vm337, %v336
        %s339 = sand.u32 %s31, 1
        %s340 = scalar_lea.sflag [#allocation9], %s339
        %s341 = sand.u32 %s31, 1
        %s342 = smul.addr %s341, 8
        %s343 = scalar_lea.vmem [#allocation8], %s342
        %p344 = scmp.lt.s32.totalorder %s22, 2
        %s345 = scalar_select %p344, %s22, 2
        %s346 = smul.addr %s345, 8
        %s347 = scalar_lea.vmem %s5, %s346
        // Predicated region
        $region155: #{atom_filter_forward.1} parent=11 // pred_check
          %p348 = pneg %p37
        $region156: #{atom_filter_forward.1} parent=11 // pred_check_branch
          %350 = sbr.rel (%p348) target = $region158
        $region157: #{atom_filter_forward.1} parent=11 // pred_region
          %s352 = ssub.s32 128, 128
          %353 = vsyncadd %s340, %s352
          %s354 = smul.addr %s22, 128
          %s355 = scalar_lea.hbm %s4, %s354
          %s357 = sshll.u32 %s343, 4
          %s358 = int_to_ptr.vmem [resolvable:$true] %s357
          %360 = dma.vmem_to_hbm [thread:$0]  %s358, 128, %s355, %s340
        $region158: #{atom_filter_forward.1} parent=11 // pred_fallthru
          _
        // Predicated region
        $region159: #{atom_filter_forward.1} parent=11 // pred_check
          %p361 = pneg %p56
        $region160: #{atom_filter_forward.1} parent=11 // pred_check_branch
          %363 = sbr.rel (%p361) target = $region162
        $region161: #{atom_filter_forward.1} parent=11 // pred_region
          _
        $region162: #{atom_filter_forward.1} parent=11 // pred_fallthru
          _
      $region12: #{atom_filter_forward.1} parent=5 // pred_fallthru
        _
      %p364 = scmp.le.s32.totalorder 1, %s22
      // Predicated region
      $region163: #{atom_filter_forward.1} parent=5 // pred_check
        %p365 = pneg %p364
      $region164: #{atom_filter_forward.1} parent=5 // pred_check_branch
        %367 = sbr.rel (%p365) target = $region166
      $region165: #{atom_filter_forward.1} parent=5 // pred_region
        %s368 = ssub.s32 %s22, 1
        // Predicated region
        $region167: #{atom_filter_forward.1} parent=165 // pred_check
          %p369 = pneg %p43
        $region168: #{atom_filter_forward.1} parent=165 // pred_check_branch
          %371 = sbr.rel (%p369) target = $region170
        $region169: #{atom_filter_forward.1} parent=165 // pred_region
          %s372 = sand.u32 %s34, 1
          %s373 = scalar_lea.sflag [#allocation9], %s372
          %s374 = sand.u32 %s34, 1
          %s375 = smul.addr %s374, 8
          %s376 = scalar_lea.vmem [#allocation8], %s375
          %377 = dma.done %s373, 128
        $region170: #{atom_filter_forward.1} parent=165 // pred_fallthru
          _
        // Predicated region
        $region171: #{atom_filter_forward.1} parent=165 // pred_check
          %p378 = pneg %p62
        $region172: #{atom_filter_forward.1} parent=165 // pred_check_branch
          %380 = sbr.rel (%p378) target = $region174
        $region173: #{atom_filter_forward.1} parent=165 // pred_region
          %p381 = scmp.lt.s32.totalorder %s27, 2
          %s382 = scalar_select %p381, %s27, 2
          %s383 = smul.addr %s382, 8
          %s384 = scalar_lea.vmem %s5, %s383
        $region174: #{atom_filter_forward.1} parent=165 // pred_fallthru
          _
      $region166: #{atom_filter_forward.1} parent=5 // pred_fallthru
        _
    $region6: #{atom_filter_forward.1} parent=1 // loop_footer
      %s26 = sadd.s32 1, %s22
    $region7: #{atom_filter_forward.1} parent=1 // loop_footer_branch
      %21 = sbr.rel target = $region3
    $region8: #{atom_filter_forward.1} parent=1 // loop_exit
      _
    %385 = vsyncpa [#allocation9], 1
    %s386 = scalar_lea.sflag [#allocation9], 1
    %387 = vsyncpa %s386, 1
  %388 = vsyncmov [#allocation4]
  %s389 = vpop.sfrf %388
  %p390 = scmp.eq.s32.totalorder %s389, 0
  %p391 = pneg %p390
  %393 = shalt.err (%p391)
  %s394 = scalar_lea.sflag [#allocation4], 1
  %395 = vsyncmov %s394
  %s396 = vpop.sfrf %395
  %p397 = scmp.eq.s32.totalorder %s396, 0
  %p398 = pneg %p397
  %400 = shalt.err (%p398)
  %s401 = scalar_lea.sflag [#allocation4], 2
  %402 = vsyncmov %s401
  %s403 = vpop.sfrf %402
  %p404 = scmp.eq.s32.totalorder %s403, 0
  %p405 = pneg %p404
  %407 = shalt.err (%p405)
  %s408 = scalar_lea.sflag [#allocation4], 3
  %409 = vsyncmov %s408
  %s410 = vpop.sfrf %409
  %p411 = scmp.eq.s32.totalorder %s410, 0
  %p412 = pneg %p411
  %414 = shalt.err (%p412)
  %s415 = scalar_lea.sflag [#allocation4], 4
  %416 = vsyncmov %s415
  %s417 = vpop.sfrf %416
  %p418 = scmp.eq.s32.totalorder %s417, 0
  %p419 = pneg %p418
  %421 = shalt.err (%p419)
  %s422 = scalar_lea.sflag [#allocation4], 5
  %423 = vsyncmov %s422
  %s424 = vpop.sfrf %423
  %p425 = scmp.eq.s32.totalorder %s424, 0
  %p426 = pneg %p425
  %428 = shalt.err (%p426)
  %s429 = scalar_lea.sflag [#allocation4], 6
  %430 = vsyncmov %s429
  %s431 = vpop.sfrf %430
  %p432 = scmp.eq.s32.totalorder %s431, 0
  %p433 = pneg %p432
  %435 = shalt.err (%p433)
  %s436 = scalar_lea.sflag [#allocation4], 7
  %437 = vsyncmov %s436
  %s438 = vpop.sfrf %437
  %p439 = scmp.eq.s32.totalorder %s438, 0
  %p440 = pneg %p439
  %442 = shalt.err (%p440)
  %s443 = scalar_lea.sflag [#allocation4], 8
  %444 = vsyncmov %s443
  %s445 = vpop.sfrf %444
  %p446 = scmp.eq.s32.totalorder %s445, 0
  %p447 = pneg %p446
  %449 = shalt.err (%p447)
  %s450 = scalar_lea.sflag [#allocation4], 9
  %451 = vsyncmov %s450
  %s452 = vpop.sfrf %451
  %p453 = scmp.eq.s32.totalorder %s452, 0
  %p454 = pneg %p453
  %456 = shalt.err (%p454)
  %s457 = scalar_lea.sflag [#allocation4], 10
  %458 = vsyncmov %s457
  %s459 = vpop.sfrf %458
  %p460 = scmp.eq.s32.totalorder %s459, 0
  %p461 = pneg %p460
  %463 = shalt.err (%p461)
  %s464 = scalar_lea.sflag [#allocation4], 11
  %465 = vsyncmov %s464
  %s466 = vpop.sfrf %465
  %p467 = scmp.eq.s32.totalorder %s466, 0
  %p468 = pneg %p467
  %470 = shalt.err (%p468)
  %s471 = scalar_lea.sflag [#allocation4], 12
  %472 = vsyncmov %s471
  %s473 = vpop.sfrf %472
  %p474 = scmp.eq.s32.totalorder %s473, 0
  %p475 = pneg %p474
  %477 = shalt.err (%p475)
  %s478 = scalar_lea.sflag [#allocation4], 13
  %479 = vsyncmov %s478
  %s480 = vpop.sfrf %479
  %p481 = scmp.eq.s32.totalorder %s480, 0
  %p482 = pneg %p481
  %484 = shalt.err (%p482)
  %s485 = scalar_lea.sflag [#allocation4], 14
  %486 = vsyncmov %s485
  %s487 = vpop.sfrf %486
  %p488 = scmp.eq.s32.totalorder %s487, 0
  %p489 = pneg %p488
  %491 = shalt.err (%p489)
  %s492 = scalar_lea.sflag [#allocation4], 15
  %493 = vsyncmov %s492
  %s494 = vpop.sfrf %493
  %p495 = scmp.eq.s32.totalorder %s494, 0
  %p496 = pneg %p495
  %498 = shalt.err (%p496)

</llo_original>
